<compile_context>
chip_gen: v7x
topology: tpu7x:2x2x1
jax: 0.10.0
libtpu: 0.0.40
codegen_flags: <defaults>
</compile_context>

<pallas_src>
import jax
import jax.numpy as jnp
from jax.experimental import pallas as pl
from jax.experimental.pallas import tpu as pltpu

EPS = 1e-5


def critic_kernel(sa_ref, bd_ref, w2s_ref, wout_ref, b12_ref, bout_ref, out_ref):
    h1, h2 = w2s_ref.shape

    b1 = b12_ref[0:1, :h1]   # (1, h1) layer-1 bias (BN0 folded)
    b2 = b12_ref[1:2, :h2]   # (1, h2) layer-2 bias (BN1 folded)

    # --- fused pass: concat(state, action) @ block_diag(w1f, w2a) ---
    # One N=(h1+h2)=256 MXU pass; bf16 operands keep it single-pass.
    sa = sa_ref[...].astype(jnp.bfloat16)
    y = jnp.dot(sa, bd_ref[...], preferred_element_type=jnp.float32)   # (TB, h1+h2)
    xs = jnp.maximum(y[:, :h1] + b1, 0.0)   # lane-128-aligned slice, no relayout
    a_term = y[:, h1:]                      # action @ w2a

    # --- layer 2: Linear -> ReLU (BN1 already folded into w2s/b2) ---
    x = jnp.dot(xs.astype(jnp.bfloat16), w2s_ref[...],
                preferred_element_type=jnp.float32) + a_term + b2
    x = jnp.maximum(x, 0.0)

    # dropout(p=0.2) is identity in eval mode
    # TODO(synk): training-mode dropout / batch-stat BatchNorm not implemented (stochastic / stateful)

    # --- output head: N=1 MXU dot, (TB, 1) store, SMEM scalar bias ---
    q = jnp.dot(x.astype(jnp.bfloat16), wout_ref[...],
                preferred_element_type=jnp.float32)
    out_ref[...] = q + bout_ref[0, 0]


def _round_up(x, m):
    return ((x + m - 1) // m) * m


def critic_forward(state, action, kparams, *, block_b=4096):
    """kparams = fold_params(params); returns q of shape (B, 1)."""
    bd, w2s, wout, b12, bout = kparams
    B = state.shape[0]
    sa = jnp.concatenate([state, action], axis=1).astype(jnp.float32)
    SA = sa.shape[1]

    if B <= 512:
        # Single full-array block; launch-bound regime, nothing to tile.
        TB, Bp = B, B
    else:
        # >= 2 grid steps so v7x's 2 TensorCores both get work; tiles are
        # multiples of 512 to amortize the ~0.35 us per-grid-step overhead.
        TB = min(block_b, _round_up(pl.cdiv(B, 2), 512))
        Bp = pl.cdiv(B, TB) * TB
        if Bp != B:
            sa = jnp.pad(sa, ((0, Bp - B), (0, 0)))

    grid = (Bp // TB,)
    out = pl.pallas_call(
        critic_kernel,
        out_shape=jax.ShapeDtypeStruct((Bp, 1), jnp.float32),
        grid=grid,
        in_specs=[
            pl.BlockSpec((TB, SA), lambda i: (i, 0)),       # concat(state, action) tile
            pl.BlockSpec(bd.shape, lambda i: (0, 0)),       # resident block-diag weights
            pl.BlockSpec(w2s.shape, lambda i: (0, 0)),      # resident layer-2 weights
            pl.BlockSpec(wout.shape, lambda i: (0, 0)),     # resident head weights
            pl.BlockSpec(b12.shape, lambda i: (0, 0)),      # packed b1/b2
            pl.BlockSpec(memory_space=pltpu.MemorySpace.SMEM),  # bout scalar
        ],
        out_specs=pl.BlockSpec((TB, 1), lambda i: (i, 0)),
        compiler_params=pltpu.CompilerParams(
            dimension_semantics=("parallel",),
            vmem_limit_bytes=32 * 1024 * 1024,
        ),
    )(sa, bd, w2s, wout, b12, bout)
    return out[:B]                                           # drop padded rows


def fold_params(params, weight_dtype=jnp.bfloat16):
    """Fold eval-mode BatchNorm affines into the adjacent Linear layers, build
    the block-diagonal fused layer-1/action RHS, and pack the small vectors."""
    (bn0_g, bn0_b, bn0_m, bn0_v,
     w1, b1, bn1_g, bn1_b, bn1_m, bn1_v,
     w2s, w2a, b2, wout, bout) = params

    s0 = bn0_g * jax.lax.rsqrt(bn0_v + EPS)          # (1, S)
    t0 = bn0_b - bn0_m * s0                          # (1, S)
    w1_f = w1 * s0.reshape(-1, 1)                    # BN0 scale into w1 rows
    b1_f = b1 + t0 @ w1                              # BN0 shift into b1

    s1 = bn1_g * jax.lax.rsqrt(bn1_v + EPS)          # (1, H1)
    t1 = bn1_b - bn1_m * s1                          # (1, H1)
    w2s_f = w2s * s1.reshape(-1, 1)                  # BN1 scale into w2s rows
    b2_f = b2 + t1 @ w2s                             # BN1 shift into b2

    S, h1 = w1.shape
    A = w2a.shape[0]
    h2 = w2s.shape[1]
    assert h1 % 128 == 0, "fused block-diagonal layout assumes lane-aligned h1"

    # Block-diagonal RHS: concat([state, action]) @ bd ->
    #   columns [:h1] = state @ w1_f (layer-1 pre-activation, minus bias)
    #   columns [h1:] = action @ w2a (the action part of layer 2)
    bd = jnp.zeros((S + A, h1 + h2), jnp.float32)
    bd = bd.at[:S, :h1].set(w1_f)
    bd = bd.at[S:, h1:].set(w2a)

    H = max(h1, h2)
    b12 = jnp.zeros((2, H), jnp.float32)
    b12 = b12.at[0, :h1].set(b1_f[0])
    b12 = b12.at[1, :h2].set(b2_f[0])

    return (bd.astype(weight_dtype), w2s_f.astype(weight_dtype),
            wout.astype(weight_dtype), b12,
            bout.astype(jnp.float32).reshape(1, 1))


def init_params(key, state_size, action_size, h1=128, h2=128):
    """Deterministic parameter construction matching the module's shapes."""
    ks = jax.random.split(key, 8)

    def uniform(k, shape, lim):
        return jax.random.uniform(k, shape, jnp.float32, -lim, lim)

    # BatchNorm1d(state_size): gamma=1, beta=0, running stats set to non-trivial
    # deterministic values so the normalization is exercised.
    bn0_g = jnp.ones((1, state_size), jnp.float32)
    bn0_b = jnp.zeros((1, state_size), jnp.float32)
    bn0_m = 0.1 * jnp.arange(state_size, dtype=jnp.float32).reshape(1, -1)
    bn0_v = 1.0 + 0.05 * jnp.arange(state_size, dtype=jnp.float32).reshape(1, -1)

    # fcs layer: Linear(state_size, h1) -> ReLU -> BatchNorm1d(h1)
    lim1 = 1.0 / jnp.sqrt(jnp.float32(state_size))
    w1 = uniform(ks[0], (state_size, h1), lim1)
    b1 = uniform(ks[1], (1, h1), lim1)
    bn1_g = jnp.ones((1, h1), jnp.float32)
    bn1_b = jnp.zeros((1, h1), jnp.float32)
    bn1_m = jnp.zeros((1, h1), jnp.float32)
    bn1_v = jnp.ones((1, h1), jnp.float32)

    # fc layer: Linear(h1 + action_size, h2) -> ReLU, stored split
    lim2 = 1.0 / jnp.sqrt(jnp.float32(h1 + action_size))
    w2s = uniform(ks[2], (h1, h2), lim2)
    w2a = uniform(ks[3], (action_size, h2), lim2)
    b2 = uniform(ks[4], (1, h2), lim2)

    # fc_out: Linear(h2, 1), weight ~ U(-0.003, 0.003)
    wout = uniform(ks[5], (h2, 1), 0.003)
    lim_out = 1.0 / jnp.sqrt(jnp.float32(h2))
    bout = uniform(ks[6], (1, 1), lim_out)

    return (bn0_g, bn0_b, bn0_m, bn0_v,
            w1, b1, bn1_g, bn1_b, bn1_m, bn1_v,
            w2s, w2a, b2, wout, bout)


def reference_forward(state, action, params):
    """Full-precision eval-mode reference matching the PyTorch module."""
    (bn0_g, bn0_b, bn0_m, bn0_v,
     w1, b1, bn1_g, bn1_b, bn1_m, bn1_v,
     w2s, w2a, b2, wout, bout) = params
    xs = (state - bn0_m) * jax.lax.rsqrt(bn0_v + EPS) * bn0_g + bn0_b
    xs = jnp.maximum(xs @ w1 + b1, 0.0)
    xs = (xs - bn1_m) * jax.lax.rsqrt(bn1_v + EPS) * bn1_g + bn1_b
    x = jnp.maximum(xs @ w2s + action @ w2a + b2, 0.0)
    return x @ wout + bout


def reference_forward_folded(sa, kparams):
    """Reference that mirrors the kernel's folded params and bf16 operand casts."""
    bd, w2s, wout, b12, bout = kparams
    h1, h2 = w2s.shape
    y = jnp.dot(sa.astype(jnp.bfloat16), bd, preferred_element_type=jnp.float32)
    xs = jnp.maximum(y[:, :h1] + b12[0:1, :h1], 0.0)
    x = jnp.maximum(jnp.dot(xs.astype(jnp.bfloat16), w2s,
                            preferred_element_type=jnp.float32)
                    + y[:, h1:] + b12[1:2, :h2], 0.0)
    return jnp.dot(x.astype(jnp.bfloat16), wout,
                   preferred_element_type=jnp.float32) + bout[0, 0]


if __name__ == "__main__":
    B, STATE_SIZE, ACTION_SIZE = 8, 16, 4

    key = jax.random.PRNGKey(0)
    k_state, k_action, k_params = jax.random.split(key, 3)

    state = jax.random.normal(k_state, (B, STATE_SIZE), jnp.float32)
    action = jax.random.normal(k_action, (B, ACTION_SIZE), jnp.float32)
    params = init_params(k_params, STATE_SIZE, ACTION_SIZE)
    kparams = fold_params(params)

    q = jax.block_until_ready(critic_forward(state, action, kparams))
    assert q.shape == (B, 1)

    sa = jnp.concatenate([state, action], axis=1)
    q_mirror = reference_forward_folded(sa, kparams)     # same bf16 operand casts
    q_f32 = reference_forward(state, action, params)     # full-precision module
    assert jnp.allclose(q, q_mirror, atol=1e-4, rtol=1e-4), \
        float(jnp.max(jnp.abs(q - q_mirror)))
    assert jnp.allclose(q, q_f32, atol=1e-2, rtol=1e-2), \
        float(jnp.max(jnp.abs(q - q_f32)))

    # Also exercise the multi-tile "parallel" grid path (padding + >=2 steps).
    B2 = 1040
    k2s, k2a = jax.random.split(jax.random.PRNGKey(1))
    state2 = jax.random.normal(k2s, (B2, STATE_SIZE), jnp.float32)
    action2 = jax.random.normal(k2a, (B2, ACTION_SIZE), jnp.float32)
    q2 = jax.block_until_ready(critic_forward(state2, action2, kparams))
    sa2 = jnp.concatenate([state2, action2], axis=1)
    q2_mirror = reference_forward_folded(sa2, kparams)
    assert q2.shape == (B2, 1)
    assert jnp.allclose(q2, q2_mirror, atol=1e-4, rtol=1e-4), \
        float(jnp.max(jnp.abs(q2 - q2_mirror)))

    print("KERNEL_OK")
</pallas_src>

<mosaic_0001>
module attributes {stable_mosaic.version = 11 : i64} {
  func.func @critic_kernel(%arg0: i32, %arg1: memref<8x20xf32, #tpu.memory_space<vmem>>, %arg2: memref<20x256xbf16, #tpu.memory_space<vmem>>, %arg3: memref<128x128xbf16, #tpu.memory_space<vmem>>, %arg4: memref<128x1xbf16, #tpu.memory_space<vmem>>, %arg5: memref<2x128xf32, #tpu.memory_space<vmem>>, %arg6: memref<1x1xf32, #tpu.memory_space<smem>>, %arg7: memref<8x1xf32, #tpu.memory_space<vmem>>) attributes {dimension_semantics = [#tpu.dimension_semantics<parallel>], iteration_bounds = array<i64: 1>, scalar_prefetch = 0 : i64, scratch_operands = 0 : i64, tpu.core_type = #tpu.core_type<tc>, window_params = [{transform_indices = @transform_0, window_bounds = array<i64: 8, 20>}, {pipeline_mode = #tpu.pipeline_mode<synchronous>, transform_indices = @transform_1, window_bounds = array<i64: 20, 256>}, {pipeline_mode = #tpu.pipeline_mode<synchronous>, transform_indices = @transform_2, window_bounds = array<i64: 128, 128>}, {pipeline_mode = #tpu.pipeline_mode<synchronous>, transform_indices = @transform_3, window_bounds = array<i64: 128, 1>}, {pipeline_mode = #tpu.pipeline_mode<synchronous>, transform_indices = @transform_4, window_bounds = array<i64: 2, 128>}, {transform_indices = @transform_5, window_bounds = array<i64: 1, 1>}, {transform_indices = @transform_6, window_bounds = array<i64: 8, 1>}]} {
    %c0 = arith.constant 0 : index
    %c0_0 = arith.constant 0 : index
    %0 = vector.load %arg5[%c0, %c0_0] : memref<2x128xf32, #tpu.memory_space<vmem>>, vector<1x128xf32>
    %c1 = arith.constant 1 : index
    %c0_1 = arith.constant 0 : index
    %1 = vector.load %arg5[%c1, %c0_1] : memref<2x128xf32, #tpu.memory_space<vmem>>, vector<1x128xf32>
    %c0_2 = arith.constant 0 : index
    %c0_3 = arith.constant 0 : index
    %2 = vector.load %arg1[%c0_2, %c0_3] : memref<8x20xf32, #tpu.memory_space<vmem>>, vector<8x20xf32>
    %3 = arith.truncf %2 : vector<8x20xf32> to vector<8x20xbf16>
    %c0_4 = arith.constant 0 : index
    %c0_5 = arith.constant 0 : index
    %4 = vector.load %arg2[%c0_4, %c0_5] : memref<20x256xbf16, #tpu.memory_space<vmem>>, vector<20x256xbf16>
    %cst = arith.constant dense<0.000000e+00> : vector<8x256xf32>
    %5 = tpu.matmul %3, %4, %cst {dimension_numbers = #tpu.dot_dimension_numbers<[1], [0], [0], [1], [0, 0, 1, 1], [], []>} : vector<8x20xbf16>, vector<20x256xbf16>, vector<8x256xf32> -> vector<8x256xf32>
    %6 = vector.extract_strided_slice %5 {offsets = [0, 0], sizes = [8, 128], strides = [1, 1]} : vector<8x256xf32> to vector<8x128xf32>
    %7 = vector.broadcast %0 : vector<1x128xf32> to vector<8x128xf32>
    %8 = arith.addf %6, %7 : vector<8x128xf32>
    %cst_6 = arith.constant 0.000000e+00 : f32
    %9 = vector.broadcast %cst_6 : f32 to vector<8x128xf32>
    %10 = arith.maximumf %8, %9 : vector<8x128xf32>
    %11 = vector.extract_strided_slice %5 {offsets = [0, 128], sizes = [8, 128], strides = [1, 1]} : vector<8x256xf32> to vector<8x128xf32>
    %12 = arith.truncf %10 : vector<8x128xf32> to vector<8x128xbf16>
    %c0_7 = arith.constant 0 : index
    %c0_8 = arith.constant 0 : index
    %13 = vector.load %arg3[%c0_7, %c0_8] : memref<128x128xbf16, #tpu.memory_space<vmem>>, vector<128x128xbf16>
    %cst_9 = arith.constant dense<0.000000e+00> : vector<8x128xf32>
    %14 = tpu.matmul %12, %13, %cst_9 {dimension_numbers = #tpu.dot_dimension_numbers<[1], [0], [0], [1], [0, 0, 1, 1], [], []>} : vector<8x128xbf16>, vector<128x128xbf16>, vector<8x128xf32> -> vector<8x128xf32>
    %15 = arith.addf %14, %11 : vector<8x128xf32>
    %16 = vector.broadcast %1 : vector<1x128xf32> to vector<8x128xf32>
    %17 = arith.addf %15, %16 : vector<8x128xf32>
    %cst_10 = arith.constant 0.000000e+00 : f32
    %18 = vector.broadcast %cst_10 : f32 to vector<8x128xf32>
    %19 = arith.maximumf %17, %18 : vector<8x128xf32>
    %20 = arith.truncf %19 : vector<8x128xf32> to vector<8x128xbf16>
    %c0_11 = arith.constant 0 : index
    %c0_12 = arith.constant 0 : index
    %21 = vector.load %arg4[%c0_11, %c0_12] : memref<128x1xbf16, #tpu.memory_space<vmem>>, vector<128x1xbf16>
    %cst_13 = arith.constant dense<0.000000e+00> : vector<8x1xf32>
    %22 = tpu.matmul %20, %21, %cst_13 {dimension_numbers = #tpu.dot_dimension_numbers<[1], [0], [0], [1], [0, 0, 1, 1], [], []>} : vector<8x128xbf16>, vector<128x1xbf16>, vector<8x1xf32> -> vector<8x1xf32>
    %c0_14 = arith.constant 0 : index
    %c0_15 = arith.constant 0 : index
    %23 = memref.load %arg6[%c0_14, %c0_15] : memref<1x1xf32, #tpu.memory_space<smem>>
    %24 = vector.broadcast %23 : f32 to vector<8x1xf32>
    %25 = arith.addf %22, %24 : vector<8x1xf32>
    %c0_16 = arith.constant 0 : index
    %c0_17 = arith.constant 0 : index
    %26 = vector.load %arg7[%c0_16, %c0_17] : memref<8x1xf32, #tpu.memory_space<vmem>>, vector<8x1xf32>
    tpu.vector_store %arg7[%c0_16, %c0_17], %25 {strides = array<i32>} : memref<8x1xf32, #tpu.memory_space<vmem>>, vector<8x1xf32>,
    return
  }
  func.func @transform_0(%arg0: i32) -> (i32, i32) {
    %c0_i32 = arith.constant 0 : i32
    %c0_i32_0 = arith.constant 0 : i32
    return %arg0, %c0_i32 : i32, i32
  }
  func.func @transform_1(%arg0: i32) -> (i32, i32) {
    %c0_i32 = arith.constant 0 : i32
    %c0_i32_0 = arith.constant 0 : i32
    %c0_i32_1 = arith.constant 0 : i32
    return %c0_i32, %c0_i32_0 : i32, i32
  }
  func.func @transform_2(%arg0: i32) -> (i32, i32) {
    %c0_i32 = arith.constant 0 : i32
    %c0_i32_0 = arith.constant 0 : i32
    %c0_i32_1 = arith.constant 0 : i32
    return %c0_i32, %c0_i32_0 : i32, i32
  }
  func.func @transform_3(%arg0: i32) -> (i32, i32) {
    %c0_i32 = arith.constant 0 : i32
    %c0_i32_0 = arith.constant 0 : i32
    %c0_i32_1 = arith.constant 0 : i32
    return %c0_i32, %c0_i32_0 : i32, i32
  }
  func.func @transform_4(%arg0: i32) -> (i32, i32) {
    %c0_i32 = arith.constant 0 : i32
    %c0_i32_0 = arith.constant 0 : i32
    %c0_i32_1 = arith.constant 0 : i32
    return %c0_i32, %c0_i32_0 : i32, i32
  }
  func.func @transform_5(%arg0: i32) -> (i32, i32) {
    %c0_i32 = arith.constant 0 : i32
    %c0_i32_0 = arith.constant 0 : i32
    %c0_i32_1 = arith.constant 0 : i32
    return %c0_i32, %c0_i32_0 : i32, i32
  }
  func.func @transform_6(%arg0: i32) -> (i32, i32) {
    %c0_i32 = arith.constant 0 : i32
    %c0_i32_0 = arith.constant 0 : i32
    return %arg0, %c0_i32 : i32, i32
  }
}

</mosaic_0001>

<llo_original>
// kernel: tpu_custom_call.1
$region0: #{tpu_custom_call.1}
  #allocation0 [shape = 'u32[]', space=smem, size = 0x4, offset = 0x4, fixed_abs, tag = 'smem constant byte address 0x4 - core index']
  #allocation1 [shape = 'u32[144,128]{1,0:T(1,128)}', space=vmem, size = 0x12000, scoped, tag = 'internal scratch']
  #allocation2 [shape = 'f32[1,1]{1,0:T(1,128)S(6)}', space=smem, size = 0x200, scoped, tag = 'scoped memory for tpu_custom_call.1']
  %s0 = inlined_call_operand.vmem [shape: f32[8,20], index: 0, kind: input, shape index: {}]
  %s1 = inlined_call_operand.hbm [shape: bf16[20,256], index: 1, kind: input, shape index: {}]
  %s2 = inlined_call_operand.vmem [shape: bf16[128,128], index: 2, kind: input, shape index: {}]
  %s3 = inlined_call_operand.vmem [shape: bf16[128,1], index: 3, kind: input, shape index: {}]
  %s4 = inlined_call_operand.vmem [shape: f32[2,128], index: 4, kind: input, shape index: {}]
  %s5 = inlined_call_operand.<no memory space> [shape: f32[1,1], index: 5, kind: input, shape index: {}]
  %s6 = inlined_call_operand.vmem [shape: f32[8,1], index: 6, kind: output, shape index: {}]
  %s7 = sld [smem:[#allocation0]]
  $region38: #{tpu_custom_call.1} parent=0
    _
  %s9 = ssub.s32 1, %s7
  %s10 = scalar_select 0, %s9, %s7
  %11 = sst [smem:[#allocation2]] %s5
  $region1: #{tpu_custom_call.1} parent=0
    #allocation3 [shape = 'u8[12288]{0}', space=vmem, size = 0x3000, scoped, tag = 'input window, operand 1, single buffered']
    #allocation4 [shape = 's32[1]{0}', space=sflag, size = 0x4, scoped, tag = 'scoped memory for tpu_custom_call.1']
    %12 = vsyncpa [#allocation4], 0
    // Predicated region
    $region2: #{tpu_custom_call.1} parent=1 // pred_check
      _
    $region3: #{tpu_custom_call.1} parent=1 // pred_check_branch
      %14 = sbr.rel (0) target = $region5
    $region4: #{tpu_custom_call.1} parent=1 // pred_region
      _
    $region5: #{tpu_custom_call.1} parent=1 // pred_fallthru
      _
    // Predicated region
    $region6: #{tpu_custom_call.1} parent=1 // pred_check
      _
    $region7: #{tpu_custom_call.1} parent=1 // pred_check_branch
      %16 = sbr.rel (0) target = $region9
    $region8: #{tpu_custom_call.1} parent=1 // pred_region
      %s18 = ssub.s32 384, 384
      %19 = vsyncadd [#allocation4], %s18
      %s20 = sshll.u32 [#allocation3], 4
      %s21 = int_to_ptr.vmem [resolvable:$true] %s20
      %26 = dma.hbm_to_vmem [thread:$0]  %s1, 384, %s21, [#allocation4], 128, 128, 8
    $region9: #{tpu_custom_call.1} parent=1 // pred_fallthru
      _
    // Predicated region
    $region10: #{tpu_custom_call.1} parent=1 // pred_check
      _
    $region11: #{tpu_custom_call.1} parent=1 // pred_check_branch
      %28 = sbr.rel (0) target = $region13
    $region12: #{tpu_custom_call.1} parent=1 // pred_region
      _
    $region13: #{tpu_custom_call.1} parent=1 // pred_fallthru
      _
    // Predicated region
    $region14: #{tpu_custom_call.1} parent=1 // pred_check
      _
    $region15: #{tpu_custom_call.1} parent=1 // pred_check_branch
      %30 = sbr.rel (0) target = $region17
    $region16: #{tpu_custom_call.1} parent=1 // pred_region
      _
    $region17: #{tpu_custom_call.1} parent=1 // pred_fallthru
      _
    // Predicated region
    $region18: #{tpu_custom_call.1} parent=1 // pred_check
      _
    $region19: #{tpu_custom_call.1} parent=1 // pred_check_branch
      %32 = sbr.rel (0) target = $region21
    $region20: #{tpu_custom_call.1} parent=1 // pred_region
      _
    $region21: #{tpu_custom_call.1} parent=1 // pred_fallthru
      _
    // Predicated region
    $region22: #{tpu_custom_call.1} parent=1 // pred_check
      _
    $region23: #{tpu_custom_call.1} parent=1 // pred_check_branch
      %34 = sbr.rel (0) target = $region25
    $region24: #{tpu_custom_call.1} parent=1 // pred_region
      _
    $region25: #{tpu_custom_call.1} parent=1 // pred_fallthru
      _
    // Predicated region
    $region26: #{tpu_custom_call.1} parent=1 // pred_check
      _
    $region27: #{tpu_custom_call.1} parent=1 // pred_check_branch
      %36 = sbr.rel (0) target = $region29
    $region28: #{tpu_custom_call.1} parent=1 // pred_region
      %37 = dma.done [#allocation4], 384
    $region29: #{tpu_custom_call.1} parent=1 // pred_fallthru
      _
    %v39 = vld [vmem:[%s4] sm:$0x1]
    %v40 = vld [vmem:[%s4 + $0x1] sm:$0x1]
    %v41 = vld [vmem:[%s0] sm:$0xff]
    %v42 = vpack.c.bf16 %v41, %v41
    %v43 = vld [vmem:[#allocation3] sm:$0xff]
    %v44 = vld [vmem:[#allocation3 + $0x8] sm:$0xff]
    %v45 = vld [vmem:[#allocation3 + $0x10] sm:$0x33]
    %v49 = vunpack.c.l.b16 %v43
    %v50 = vunpack.c.h.b16 %v43
    %v51 = vunpack.c.l.b16 %v44
    %v52 = vunpack.c.h.b16 %v44
    %v53 = vunpack.c.l.b16 %v45
    %v54 = vunpack.c.h.b16 %v45
    %v55 = vpack.c.b16 %v51, %v49
    %v56 = vpack.c.b16 %v52, %v50
    %v57 = vpack.c.b16 %v53, %v53
    %v58 = vpack.c.b16 %v54, %v54
    %vm61 = vcmask 162816
    %v63 = vsel %vm61, %v42, 0
    %vm65 = vcmask 1041408
    %v67 = vsel %vm65, %v57, 0
    %v70 = vsel %vm65, %v58, 0
    %72 = vmatprep.subr.bf16.mxu0 %v56
    %73 = vmatpush1.bf16.msra.mxu0 %v55
    %74 = vmatprep.subr.bf16.mxu0 %v70
    %75 = vmatpush1.bf16.msra.mxu0 %v67
    %76 = vmatprep.subr.bf16.mxu0 0
    %77 = vmatpush1.bf16.msra.mxu0 0
    %78 = vmatprep.subr.bf16.mxu0 0
    %79 = vmatpush1.bf16.msra.mxu0 0
    %80 = vmatprep.subr.bf16.mxu0 0
    %81 = vmatpush1.bf16.msra.mxu0 0
    %82 = vmatprep.subr.bf16.mxu0 0
    %83 = vmatpush1.bf16.msra.mxu0 0
    %84 = vmatprep.subr.bf16.mxu0 0
    %85 = vmatpush1.bf16.msra.mxu0 0
    %86 = vmatprep.subr.bf16.mxu0 0
    %87 = vmatpush1.bf16.msra.mxu0 0
    %88 = vmatprep.subr.bf16.mxu0 0
    %89 = vmatpush1.bf16.msra.mxu0 0
    %90 = vmatprep.subr.bf16.mxu0 0
    %91 = vmatpush1.bf16.msra.mxu0 0
    %92 = vmatprep.subr.bf16.mxu0 0
    %93 = vmatpush1.bf16.msra.mxu0 0
    %94 = vmatprep.subr.bf16.mxu0 0
    %95 = vmatpush1.bf16.msra.mxu0 0
    %96 = vmatprep.subr.bf16.mxu0 0
    %97 = vmatpush1.bf16.msra.mxu0 0
    %98 = vmatprep.subr.bf16.mxu0 0
    %99 = vmatpush1.bf16.msra.mxu0 0
    %100 = vmatprep.subr.bf16.mxu0 0
    %101 = vmatpush1.bf16.msra.mxu0 0
    %102 = vmatprep.subr.bf16.mxu0 0
    %103 = vmatpush1.bf16.msra.mxu0 0
    %104 = vmatprep.mubr.bf16.mxu0 0
    %105 = vmatmul.mubr.bf16.gmra.mrb[0].mxu0 %v63
    %v106 = vpop.f32.mrb[0].mxu0
    %v107 = vadd.f32 0.0, %v106
    %v108 = vpop.f32.mrb[0].mxu0
    %v109 = vadd.f32 0.0, %v108
    %v110 = vpop.f32.mrb[0].mxu0
    %v111 = vpop.f32.mrb[0].mxu0
    %112 = vdwg.mxu0
    %v113 = vlaneseq
    %v114 = vshrl.u32 %v113, 7
    %v115 = vsub.s32 0, %v114
    %v116 = vrot.slane %v39, %v115
    %v117 = vadd.f32 %v107, %v116
    %v118 = vmax.f32 %v117, 0.0
    %v119 = vpack.c.bf16 %v118, %v118
    %v120 = vld [vmem:[%s2] sm:$0xf]
    %v121 = vld [vmem:[%s2 + $0x4] sm:$0xf]
    %v122 = vld [vmem:[%s2 + $0x8] sm:$0xf]
    %v123 = vld [vmem:[%s2 + $0xc] sm:$0xf]
    %v124 = vld [vmem:[%s2 + $0x10] sm:$0xf]
    %v125 = vld [vmem:[%s2 + $0x14] sm:$0xf]
    %v126 = vld [vmem:[%s2 + $0x18] sm:$0xf]
    %v127 = vld [vmem:[%s2 + $0x1c] sm:$0xf]
    %v128 = vld [vmem:[%s2 + $0x20] sm:$0xf]
    %v129 = vld [vmem:[%s2 + $0x24] sm:$0xf]
    %v130 = vld [vmem:[%s2 + $0x28] sm:$0xf]
    %v131 = vld [vmem:[%s2 + $0x2c] sm:$0xf]
    %v132 = vld [vmem:[%s2 + $0x30] sm:$0xf]
    %v133 = vld [vmem:[%s2 + $0x34] sm:$0xf]
    %v134 = vld [vmem:[%s2 + $0x38] sm:$0xf]
    %v135 = vld [vmem:[%s2 + $0x3c] sm:$0xf]
    %v152 = vunpack.c.l.b16 %v120
    %v153 = vunpack.c.l.b16 %v121
    %v154 = vunpack.c.l.b16 %v122
    %v155 = vunpack.c.l.b16 %v123
    %v156 = vunpack.c.l.b16 %v124
    %v157 = vunpack.c.l.b16 %v125
    %v158 = vunpack.c.l.b16 %v126
    %v159 = vunpack.c.l.b16 %v127
    %v160 = vunpack.c.l.b16 %v128
    %v161 = vunpack.c.l.b16 %v129
    %v162 = vunpack.c.l.b16 %v130
    %v163 = vunpack.c.l.b16 %v131
    %v164 = vunpack.c.l.b16 %v132
    %v165 = vunpack.c.l.b16 %v133
    %v166 = vunpack.c.l.b16 %v134
    %v167 = vunpack.c.l.b16 %v135
    %v168 = vpack.c.b16 %v153, %v152
    %v169 = vpack.c.b16 %v155, %v154
    %v170 = vpack.c.b16 %v157, %v156
    %v171 = vpack.c.b16 %v159, %v158
    %v172 = vpack.c.b16 %v161, %v160
    %v173 = vpack.c.b16 %v163, %v162
    %v174 = vpack.c.b16 %v165, %v164
    %v175 = vpack.c.b16 %v167, %v166
    %184 = vmatprep.subr.bf16.mxu0 0
    %185 = vmatpush1.bf16.msra.mxu0 %v168
    %186 = vmatprep.subr.bf16.mxu0 0
    %187 = vmatpush1.bf16.msra.mxu0 %v169
    %188 = vmatprep.subr.bf16.mxu0 0
    %189 = vmatpush1.bf16.msra.mxu0 %v170
    %190 = vmatprep.subr.bf16.mxu0 0
    %191 = vmatpush1.bf16.msra.mxu0 %v171
    %192 = vmatprep.subr.bf16.mxu0 0
    %193 = vmatpush1.bf16.msra.mxu0 %v172
    %194 = vmatprep.subr.bf16.mxu0 0
    %195 = vmatpush1.bf16.msra.mxu0 %v173
    %196 = vmatprep.subr.bf16.mxu0 0
    %197 = vmatpush1.bf16.msra.mxu0 %v174
    %198 = vmatprep.subr.bf16.mxu0 0
    %199 = vmatpush1.bf16.msra.mxu0 %v175
    %200 = vmatprep.subr.bf16.mxu0 0
    %201 = vmatpush1.bf16.msra.mxu0 0
    %202 = vmatprep.subr.bf16.mxu0 0
    %203 = vmatpush1.bf16.msra.mxu0 0
    %204 = vmatprep.subr.bf16.mxu0 0
    %205 = vmatpush1.bf16.msra.mxu0 0
    %206 = vmatprep.subr.bf16.mxu0 0
    %207 = vmatpush1.bf16.msra.mxu0 0
    %208 = vmatprep.subr.bf16.mxu0 0
    %209 = vmatpush1.bf16.msra.mxu0 0
    %210 = vmatprep.subr.bf16.mxu0 0
    %211 = vmatpush1.bf16.msra.mxu0 0
    %212 = vmatprep.subr.bf16.mxu0 0
    %213 = vmatpush1.bf16.msra.mxu0 0
    %214 = vmatprep.subr.bf16.mxu0 0
    %215 = vmatpush1.bf16.msra.mxu0 0
    %216 = vmatprep.mubr.bf16.mxu0 0
    %217 = vmatmul.mubr.bf16.gmra.mrb[0].mxu0 %v119
    %v218 = vpop.f32.mrb[0].mxu0
    %v219 = vadd.f32 %v109, %v218
    %v220 = vpop.f32.mrb[0].mxu0
    %v221 = vpop.f32.mrb[0].mxu0
    %v222 = vpop.f32.mrb[0].mxu0
    %223 = vdwg.mxu0
    %v224 = vlaneseq
    %v225 = vshrl.u32 %v224, 7
    %v226 = vsub.s32 0, %v225
    %v227 = vrot.slane %v40, %v226
    %v228 = vadd.f32 %v219, %v227
    %v229 = vmax.f32 %v228, 0.0
    %v230 = vpack.c.bf16 %v229, %v229
    %v231 = vld [vmem:[%s3] sm:$0xf]
    %v232 = vld [vmem:[%s3 + $0x4] sm:$0xf]
    %v233 = vld [vmem:[%s3 + $0x8] sm:$0xf]
    %v234 = vld [vmem:[%s3 + $0xc] sm:$0xf]
    %v235 = vld [vmem:[%s3 + $0x10] sm:$0xf]
    %v236 = vld [vmem:[%s3 + $0x14] sm:$0xf]
    %v237 = vld [vmem:[%s3 + $0x18] sm:$0xf]
    %v238 = vld [vmem:[%s3 + $0x1c] sm:$0xf]
    %v239 = vld [vmem:[%s3 + $0x20] sm:$0xf]
    %v240 = vld [vmem:[%s3 + $0x24] sm:$0xf]
    %v241 = vld [vmem:[%s3 + $0x28] sm:$0xf]
    %v242 = vld [vmem:[%s3 + $0x2c] sm:$0xf]
    %v243 = vld [vmem:[%s3 + $0x30] sm:$0xf]
    %v244 = vld [vmem:[%s3 + $0x34] sm:$0xf]
    %v245 = vld [vmem:[%s3 + $0x38] sm:$0xf]
    %v246 = vld [vmem:[%s3 + $0x3c] sm:$0xf]
    %s247 = sld [smem:[#allocation2]]
    %v248 = vstv %s247
    %v265 = vunpack.c.l.b16 %v231
    %v266 = vunpack.c.l.b16 %v232
    %v267 = vunpack.c.l.b16 %v233
    %v268 = vunpack.c.l.b16 %v234
    %v269 = vunpack.c.l.b16 %v235
    %v270 = vunpack.c.l.b16 %v236
    %v271 = vunpack.c.l.b16 %v237
    %v272 = vunpack.c.l.b16 %v238
    %v273 = vunpack.c.l.b16 %v239
    %v274 = vunpack.c.l.b16 %v240
    %v275 = vunpack.c.l.b16 %v241
    %v276 = vunpack.c.l.b16 %v242
    %v277 = vunpack.c.l.b16 %v243
    %v278 = vunpack.c.l.b16 %v244
    %v279 = vunpack.c.l.b16 %v245
    %v280 = vunpack.c.l.b16 %v246
    %v281 = vpack.c.b16 %v266, %v265
    %v282 = vpack.c.b16 %v268, %v267
    %v283 = vpack.c.b16 %v270, %v269
    %v284 = vpack.c.b16 %v272, %v271
    %v285 = vpack.c.b16 %v274, %v273
    %v286 = vpack.c.b16 %v276, %v275
    %v287 = vpack.c.b16 %v278, %v277
    %v288 = vpack.c.b16 %v280, %v279
    %297 = vmatprep.subr.bf16.mxu0 0
    %298 = vmatpush1.bf16.msra.mxu0 %v281
    %299 = vmatprep.subr.bf16.mxu0 0
    %300 = vmatpush1.bf16.msra.mxu0 %v282
    %301 = vmatprep.subr.bf16.mxu0 0
    %302 = vmatpush1.bf16.msra.mxu0 %v283
    %303 = vmatprep.subr.bf16.mxu0 0
    %304 = vmatpush1.bf16.msra.mxu0 %v284
    %305 = vmatprep.subr.bf16.mxu0 0
    %306 = vmatpush1.bf16.msra.mxu0 %v285
    %307 = vmatprep.subr.bf16.mxu0 0
    %308 = vmatpush1.bf16.msra.mxu0 %v286
    %309 = vmatprep.subr.bf16.mxu0 0
    %310 = vmatpush1.bf16.msra.mxu0 %v287
    %311 = vmatprep.subr.bf16.mxu0 0
    %312 = vmatpush1.bf16.msra.mxu0 %v288
    %313 = vmatprep.subr.bf16.mxu0 0
    %314 = vmatpush1.bf16.msra.mxu0 0
    %315 = vmatprep.subr.bf16.mxu0 0
    %316 = vmatpush1.bf16.msra.mxu0 0
    %317 = vmatprep.subr.bf16.mxu0 0
    %318 = vmatpush1.bf16.msra.mxu0 0
    %319 = vmatprep.subr.bf16.mxu0 0
    %320 = vmatpush1.bf16.msra.mxu0 0
    %321 = vmatprep.subr.bf16.mxu0 0
    %322 = vmatpush1.bf16.msra.mxu0 0
    %323 = vmatprep.subr.bf16.mxu0 0
    %324 = vmatpush1.bf16.msra.mxu0 0
    %325 = vmatprep.subr.bf16.mxu0 0
    %326 = vmatpush1.bf16.msra.mxu0 0
    %327 = vmatprep.subr.bf16.mxu0 0
    %328 = vmatpush1.bf16.msra.mxu0 0
    %329 = vmatprep.mubr.bf16.mxu0 0
    %330 = vmatmul.mubr.bf16.gmra.mrb[0].mxu0 %v230
    %v331 = vpop.f32.mrb[0].mxu0
    %v332 = vadd.f32 %v248, %v331
    %v333 = vpop.f32.mrb[0].mxu0
    %v334 = vpop.f32.mrb[0].mxu0
    %v335 = vpop.f32.mrb[0].mxu0
    %336 = vdwg.mxu0
    %vm337 = vcmask 7168
    %338 = vst.msk [vmem:[%s6] sm:$0xff] %vm337, %v332
    // Predicated region
    $region30: #{tpu_custom_call.1} parent=1 // pred_check
      _
    $region31: #{tpu_custom_call.1} parent=1 // pred_check_branch
      %340 = sbr.rel (0) target = $region33
    $region32: #{tpu_custom_call.1} parent=1 // pred_region
      _
    $region33: #{tpu_custom_call.1} parent=1 // pred_fallthru
      _
    // Predicated region
    $region34: #{tpu_custom_call.1} parent=1 // pred_check
      _
    $region35: #{tpu_custom_call.1} parent=1 // pred_check_branch
      %342 = sbr.rel (0) target = $region37
    $region36: #{tpu_custom_call.1} parent=1 // pred_region
      _
    $region37: #{tpu_custom_call.1} parent=1 // pred_fallthru
      _
    %343 = vsyncpa [#allocation4], 1

</llo_original>
